<compile_context>
chip_gen: v5e
topology: v5e:2x2
jax: 0.10.0
libtpu: 0.0.40
codegen_flags: <defaults>
</compile_context>

<pallas_src>
import functools

import jax
import jax.numpy as jnp
from jax.experimental import pallas as pl
from jax.experimental.pallas import tpu as pltpu


def _round_up(x, m):
    return ((x + m - 1) // m) * m


def _embed_tile_kernel(ids_ref, clk_ref, item_tab_ref, click_tab_ref,
                       item_out_ref, click_out_ref, *, num_items):
    # ids/clk: (TILE_N, 1) int32; tables fully VMEM-resident.
    ids = ids_ref[...]
    clk = clk_ref[...]
    item_tab = item_tab_ref[...]       # (num_items, item_dim)
    click_tab = click_tab_ref[...]     # (2, click_dim)

    tile_n = ids.shape[0]

    # Item embedding lookup: one-hot(ids) @ table on the MXU. No per-row DMAs,
    # no data-dependent gather lowering; out-of-range ids -> all-zero row
    # (instead of an OOB HBM DMA fault).
    col = jax.lax.broadcasted_iota(jnp.int32, (tile_n, num_items), 1)
    onehot = (ids == col).astype(item_tab.dtype)
    item_out_ref[...] = jnp.dot(
        onehot, item_tab, preferred_element_type=jnp.float32
    ).astype(item_out_ref.dtype)

    # Click embedding lookup: 2-way select between the two table rows (VPU).
    c0 = click_tab[0:1, :]             # (1, click_dim)
    c1 = click_tab[1:2, :]
    click_out_ref[...] = jnp.where(clk == 1, c1, c0).astype(click_out_ref.dtype)


def abstract_state_encoder_embed(item_ids, clicks, item_table, click_table,
                                 *, max_single_tile=1024):
    """Embedding lookups of AbstractStateEncoder.

    item_ids : (B, rec_size) int32 — observed item indices
    clicks   : (B, rec_size) int32 in {0, 1}
    returns  : item_emb  (B, rec_size, item_embedd_dim),
               click_emb (B, rec_size, click_embedd_dim)
    """
    B, R = item_ids.shape
    N = B * R
    num_items, item_dim = item_table.shape
    num_click_rows, click_dim = click_table.shape
    assert num_click_rows == 2

    itemsize = jnp.dtype(item_table.dtype).itemsize
    table_bytes = (item_table.size + click_table.size) * itemsize
    if table_bytes > (24 << 20):
        # TODO(synk): manual multi-outstanding-DMA gather path for huge tables.
        raise NotImplementedError(
            "item table too large for the VMEM-resident gather path")

    # Tile over the flattened row dimension N.
    if N <= max_single_tile:
        tile_n = _round_up(N, 8)       # single tile, padded to sublane multiple
        n_pad = tile_n
    else:
        tile_n = 512                   # multiple of 8 (and of 128)
        n_pad = _round_up(N, tile_n)
    num_tiles = n_pad // tile_n

    ids = item_ids.astype(jnp.int32).reshape(N)
    clk = clicks.astype(jnp.int32).reshape(N)
    if n_pad != N:
        pad = n_pad - N
        ids = jnp.pad(ids, (0, pad))   # pad with id 0 / click 0 (valid rows,
        clk = jnp.pad(clk, (0, pad))   # sliced off after the kernel)
    ids = ids.reshape(n_pad, 1)
    clk = clk.reshape(n_pad, 1)

    # Cost: tables read once, ids/clicks read once, outputs written once,
    # plus the one-hot matmul FLOPs.
    flops = 2 * n_pad * num_items * item_dim
    bytes_accessed = (table_bytes
                      + n_pad * 2 * 4
                      + n_pad * (item_dim + click_dim) * itemsize)
    cost = pl.CostEstimate(flops=flops, transcendentals=0,
                           bytes_accessed=bytes_accessed)

    # Raise the scoped VMEM limit only if resident tables + double-buffered
    # tiles need it (v5e scoped default ~16 MiB).
    tile_bytes = tile_n * ((item_dim + click_dim) * itemsize + 2 * 4)
    vmem_need = 2 * (tile_bytes + table_bytes)
    vmem_limit = None
    if vmem_need > (16 << 20):
        vmem_limit = int(min(vmem_need + (4 << 20), 100 << 20))

    grid_spec = pltpu.PrefetchScalarGridSpec(
        num_scalar_prefetch=0,
        grid=(num_tiles,),
        in_specs=[
            pl.BlockSpec((tile_n, 1), lambda i: (i, 0)),            # ids
            pl.BlockSpec((tile_n, 1), lambda i: (i, 0)),            # clicks
            pl.BlockSpec((num_items, item_dim), lambda i: (0, 0)),  # item table
            pl.BlockSpec((2, click_dim), lambda i: (0, 0)),         # click table
        ],
        out_specs=(
            pl.BlockSpec((tile_n, item_dim), lambda i: (i, 0)),
            pl.BlockSpec((tile_n, click_dim), lambda i: (i, 0)),
        ),
    )

    kernel = functools.partial(_embed_tile_kernel, num_items=num_items)

    item_emb, click_emb = pl.pallas_call(
        kernel,
        grid_spec=grid_spec,
        out_shape=(
            jax.ShapeDtypeStruct((n_pad, item_dim), item_table.dtype),
            jax.ShapeDtypeStruct((n_pad, click_dim), click_table.dtype),
        ),
        compiler_params=pltpu.CompilerParams(
            # Each tile writes disjoint output blocks -> shard across v7x's
            # two TensorCores; no-op on single-TC v5e/v6e.
            dimension_semantics=("parallel",),
            vmem_limit_bytes=vmem_limit),
        cost_estimate=cost,
    )(ids, clk, item_table, click_table)

    return (item_emb[:N].reshape(B, R, item_dim),
            click_emb[:N].reshape(B, R, click_dim))


if __name__ == "__main__":
    # Deterministic synthetic config (mirrors __init__ shape logic):
    #   num_items=32, item_embedd_dim=args.item_dim_se=16,
    #   click_embedd_dim=args.click_dim_se=8, rec_size=8, batch=2.
    key = jax.random.PRNGKey(0)
    k_items, k_clicktab, k_ids, k_clk = jax.random.split(key, 4)

    num_items, item_dim = 32, 16
    click_dim = 8
    B, rec_size = 2, 8

    # nn.Embedding default init: N(0, 1)
    item_table = jax.random.normal(k_items, (num_items, item_dim),
                                   dtype=jnp.float32)
    click_table = jax.random.normal(k_clicktab, (2, click_dim),
                                    dtype=jnp.float32)

    item_ids = jax.random.randint(k_ids, (B, rec_size), 0, num_items,
                                  dtype=jnp.int32)
    clicks = jax.random.randint(k_clk, (B, rec_size), 0, 2, dtype=jnp.int32)

    item_emb, click_emb = abstract_state_encoder_embed(
        item_ids, clicks, item_table, click_table)
    jax.block_until_ready((item_emb, click_emb))

    # Reference check (plain JAX gathers, same semantics as nn.Embedding lookup).
    ref_item = jnp.take(item_table, item_ids, axis=0)
    ref_click = jnp.take(click_table, clicks, axis=0)
    assert item_emb.shape == (B, rec_size, item_dim)
    assert click_emb.shape == (B, rec_size, click_dim)
    assert jnp.allclose(item_emb, ref_item, atol=1e-5)
    assert jnp.allclose(click_emb, ref_click, atol=1e-6)

    print("KERNEL_OK")
</pallas_src>

<mosaic_0001>
module attributes {stable_mosaic.version = 11 : i64} {
  func.func @_embed_tile_kernel(%arg0: i32, %arg1: memref<16x1xi32, #tpu.memory_space<vmem>>, %arg2: memref<16x1xi32, #tpu.memory_space<vmem>>, %arg3: memref<32x16xf32, #tpu.memory_space<vmem>>, %arg4: memref<2x8xf32, #tpu.memory_space<vmem>>, %arg5: memref<16x16xf32, #tpu.memory_space<vmem>>, %arg6: memref<16x8xf32, #tpu.memory_space<vmem>>) attributes {dimension_semantics = [#tpu.dimension_semantics<parallel>], iteration_bounds = array<i64: 1>, scalar_prefetch = 0 : i64, scratch_operands = 0 : i64, tpu.core_type = #tpu.core_type<tc>, window_params = [{transform_indices = @transform_0, window_bounds = array<i64: 16, 1>}, {transform_indices = @transform_1, window_bounds = array<i64: 16, 1>}, {pipeline_mode = #tpu.pipeline_mode<synchronous>, transform_indices = @transform_2, window_bounds = array<i64: 32, 16>}, {pipeline_mode = #tpu.pipeline_mode<synchronous>, transform_indices = @transform_3, window_bounds = array<i64: 2, 8>}, {transform_indices = @transform_4, window_bounds = array<i64: 16, 16>}, {transform_indices = @transform_5, window_bounds = array<i64: 16, 8>}]} {
    %c0 = arith.constant 0 : index
    %c0_0 = arith.constant 0 : index
    %0 = vector.load %arg1[%c0, %c0_0] : memref<16x1xi32, #tpu.memory_space<vmem>>, vector<16x1xi32>
    %c0_1 = arith.constant 0 : index
    %c0_2 = arith.constant 0 : index
    %1 = vector.load %arg2[%c0_1, %c0_2] : memref<16x1xi32, #tpu.memory_space<vmem>>, vector<16x1xi32>
    %c0_3 = arith.constant 0 : index
    %c0_4 = arith.constant 0 : index
    %2 = vector.load %arg3[%c0_3, %c0_4] : memref<32x16xf32, #tpu.memory_space<vmem>>, vector<32x16xf32>
    %c0_5 = arith.constant 0 : index
    %c0_6 = arith.constant 0 : index
    %3 = vector.load %arg4[%c0_5, %c0_6] : memref<2x8xf32, #tpu.memory_space<vmem>>, vector<2x8xf32>
    %4 = tpu.iota {dimensions = array<i32: 1>} : vector<16x32xi32>
    %5 = vector.broadcast %0 : vector<16x1xi32> to vector<16x32xi32>
    %6 = arith.cmpi eq, %5, %4 : vector<16x32xi32>
    %7 = arith.extui %6 : vector<16x32xi1> to vector<16x32xi32>
    %8 = arith.sitofp %7 : vector<16x32xi32> to vector<16x32xf32>
    %cst = arith.constant dense<0.000000e+00> : vector<16x16xf32>
    %9 = tpu.matmul %8, %2, %cst {dimension_numbers = #tpu.dot_dimension_numbers<[1], [0], [0], [1], [0, 0, 1, 1], [], []>} : vector<16x32xf32>, vector<32x16xf32>, vector<16x16xf32> -> vector<16x16xf32>
    %c0_7 = arith.constant 0 : index
    %c0_8 = arith.constant 0 : index
    %10 = vector.load %arg5[%c0_7, %c0_8] : memref<16x16xf32, #tpu.memory_space<vmem>>, vector<16x16xf32>
    tpu.vector_store %arg5[%c0_7, %c0_8], %9 {strides = array<i32>} : memref<16x16xf32, #tpu.memory_space<vmem>>, vector<16x16xf32>,
    %11 = vector.extract_strided_slice %3 {offsets = [0, 0], sizes = [1, 8], strides = [1, 1]} : vector<2x8xf32> to vector<1x8xf32>
    %12 = vector.extract_strided_slice %3 {offsets = [1, 0], sizes = [1, 8], strides = [1, 1]} : vector<2x8xf32> to vector<1x8xf32>
    %c1_i32 = arith.constant 1 : i32
    %13 = vector.broadcast %c1_i32 : i32 to vector<16x1xi32>
    %14 = arith.cmpi eq, %1, %13 : vector<16x1xi32>
    %15 = vector.shape_cast %14 : vector<16x1xi1> to vector<16x1xi1>
    %16 = vector.broadcast %15 : vector<16x1xi1> to vector<16x8xi1>
    %17 = vector.shape_cast %12 : vector<1x8xf32> to vector<1x8xf32>
    %18 = vector.broadcast %17 : vector<1x8xf32> to vector<16x8xf32>
    %19 = vector.shape_cast %11 : vector<1x8xf32> to vector<1x8xf32>
    %20 = vector.broadcast %19 : vector<1x8xf32> to vector<16x8xf32>
    %21 = arith.select %16, %18, %20 : vector<16x8xi1>, vector<16x8xf32>
    %c0_9 = arith.constant 0 : index
    %c0_10 = arith.constant 0 : index
    %22 = vector.load %arg6[%c0_9, %c0_10] : memref<16x8xf32, #tpu.memory_space<vmem>>, vector<16x8xf32>
    tpu.vector_store %arg6[%c0_9, %c0_10], %21 {strides = array<i32>} : memref<16x8xf32, #tpu.memory_space<vmem>>, vector<16x8xf32>,
    return
  }
  func.func @transform_0(%arg0: i32) -> (i32, i32) {
    %c0_i32 = arith.constant 0 : i32
    %c0_i32_0 = arith.constant 0 : i32
    return %arg0, %c0_i32 : i32, i32
  }
  func.func @transform_1(%arg0: i32) -> (i32, i32) {
    %c0_i32 = arith.constant 0 : i32
    %c0_i32_0 = arith.constant 0 : i32
    return %arg0, %c0_i32 : i32, i32
  }
  func.func @transform_2(%arg0: i32) -> (i32, i32) {
    %c0_i32 = arith.constant 0 : i32
    %c0_i32_0 = arith.constant 0 : i32
    %c0_i32_1 = arith.constant 0 : i32
    return %c0_i32, %c0_i32_0 : i32, i32
  }
  func.func @transform_3(%arg0: i32) -> (i32, i32) {
    %c0_i32 = arith.constant 0 : i32
    %c0_i32_0 = arith.constant 0 : i32
    %c0_i32_1 = arith.constant 0 : i32
    return %c0_i32, %c0_i32_0 : i32, i32
  }
  func.func @transform_4(%arg0: i32) -> (i32, i32) {
    %c0_i32 = arith.constant 0 : i32
    %c0_i32_0 = arith.constant 0 : i32
    return %arg0, %c0_i32 : i32, i32
  }
  func.func @transform_5(%arg0: i32) -> (i32, i32) {
    %c0_i32 = arith.constant 0 : i32
    %c0_i32_0 = arith.constant 0 : i32
    return %arg0, %c0_i32 : i32, i32
  }
}

</mosaic_0001>

<llo_original>
// kernel: tpu_custom_call.1
$region0: #{tpu_custom_call.1}
  #allocation0 [shape = 'u32[]', space=smem, size = 0x4, offset = 0x4, fixed_abs, tag = 'smem constant byte address 0x4 - core index']
  #allocation1 [shape = 'u32[72,128]{1,0:T(1,128)}', space=vmem, size = 0x9000, scoped, tag = 'internal scratch']
  %s0 = inlined_call_operand.vmem [shape: s32[16,1], index: 0, kind: input, shape index: {}]
  %s1 = inlined_call_operand.vmem [shape: s32[16,1], index: 1, kind: input, shape index: {}]
  %s2 = inlined_call_operand.vmem [shape: f32[32,16], index: 2, kind: input, shape index: {}]
  %s3 = inlined_call_operand.vmem [shape: f32[2,8], index: 3, kind: input, shape index: {}]
  %s4 = inlined_call_operand.hbm [shape: f32[16,16], index: 4, kind: output, shape index: {0}]
  %s5 = inlined_call_operand.vmem [shape: f32[16,8], index: 5, kind: output, shape index: {1}]
  %6 = xla_tuple %s4, %s5
  %s7 = sld [smem:[#allocation0]]
  $region34: #{tpu_custom_call.1} parent=0
    _
  %s9 = ssub.s32 1, %s7
  %s10 = scalar_select 0, %s9, %s7
  $region1: #{tpu_custom_call.1} parent=0
    #allocation2 [shape = 'u8[8192]{0}', space=vmem, size = 0x2000, scoped, tag = 'output window, operand 0, single buffered']
    #allocation3 [shape = 's32[1]{0}', space=sflag, size = 0x4, scoped, tag = 'scoped memory for tpu_custom_call.1']
    %11 = vsyncpa [#allocation3], 0
    // Predicated region
    $region2: #{tpu_custom_call.1} parent=1 // pred_check
      _
    $region3: #{tpu_custom_call.1} parent=1 // pred_check_branch
      %13 = sbr.rel (0) target = $region5
    $region4: #{tpu_custom_call.1} parent=1 // pred_region
      _
    $region5: #{tpu_custom_call.1} parent=1 // pred_fallthru
      _
    // Predicated region
    $region6: #{tpu_custom_call.1} parent=1 // pred_check
      _
    $region7: #{tpu_custom_call.1} parent=1 // pred_check_branch
      %15 = sbr.rel (0) target = $region9
    $region8: #{tpu_custom_call.1} parent=1 // pred_region
      _
    $region9: #{tpu_custom_call.1} parent=1 // pred_fallthru
      _
    // Predicated region
    $region10: #{tpu_custom_call.1} parent=1 // pred_check
      _
    $region11: #{tpu_custom_call.1} parent=1 // pred_check_branch
      %17 = sbr.rel (0) target = $region13
    $region12: #{tpu_custom_call.1} parent=1 // pred_region
      _
    $region13: #{tpu_custom_call.1} parent=1 // pred_fallthru
      _
    // Predicated region
    $region14: #{tpu_custom_call.1} parent=1 // pred_check
      _
    $region15: #{tpu_custom_call.1} parent=1 // pred_check_branch
      %19 = sbr.rel (0) target = $region17
    $region16: #{tpu_custom_call.1} parent=1 // pred_region
      _
    $region17: #{tpu_custom_call.1} parent=1 // pred_fallthru
      _
    %v20 = vld [vmem:[%s0] sm:$0xff]
    %v21 = vld [vmem:[%s0 + $0x8] sm:$0xff]
    %v22 = vld [vmem:[%s1] sm:$0xff]
    %v23 = vld [vmem:[%s1 + $0x8] sm:$0xff]
    %v24 = vld [vmem:[%s2] sm:$0xff]
    %v25 = vld [vmem:[%s2 + $0x8] sm:$0xff]
    %v26 = vld [vmem:[%s2 + $0x10] sm:$0xff]
    %v27 = vld [vmem:[%s2 + $0x18] sm:$0xff]
    %v28 = vld [vmem:[%s3] sm:$0x3]
    %v29 = vlaneseq
    %v30 = vand.u32 %v29, 127
    %31 = vset.pattern.permute.xlu0 0
    %32 = vperm.xlu0 %31, %v20
    %v33 = vpop.permute.xlu0 %32
    %34 = vset.pattern.permute.xlu0 0
    %35 = vperm.xlu0 %34, %v21
    %v36 = vpop.permute.xlu0 %35
    %vm37 = vcmp.eq.s32.totalorder %v33, %v30
    %vm38 = vcmp.eq.s32.totalorder %v36, %v30
    %v39 = vsel %vm37, 1, 0
    %v40 = vsel %vm38, 1, 0
    %v41 = vcvt.s32.f32 %v39
    %v42 = vcvt.s32.f32 %v40
    %vm43 = vcmask 261120
    %v45 = vsel %vm43, %v41, 0
    %v48 = vsel %vm43, %v42, 0
    %50 = vmatpush.msra.mxu0 0.0
    %51 = vmatpush.msra.mxu0 0.0
    %52 = vmatpush.msra.mxu0 0.0
    %53 = vmatpush.msra.mxu0 0.0
    %54 = vmatpush.msra.mxu0 0.0
    %55 = vmatpush.msra.mxu0 0.0
    %56 = vmatpush.msra.mxu0 0.0
    %57 = vmatpush.msra.mxu0 0.0
    %58 = vmatpush.msra.mxu0 0.0
    %59 = vmatpush.msra.mxu0 0.0
    %60 = vmatpush.msra.mxu0 0.0
    %61 = vmatpush.msra.mxu0 0.0
    %62 = vmatpush.msra.mxu0 %v27
    %63 = vmatpush.msra.mxu0 %v26
    %64 = vmatpush.msra.mxu0 %v25
    %65 = vmatpush.msra.mxu0 %v24
    %66 = vmatmul.f32.gmra.mxu0 %v45
    %v67 = vpop.f32.mrf.mxu0
    %v68 = vadd.f32 0.0, %v67
    %69 = vmatmul.f32.gmra.mxu0 %v48
    %v70 = vpop.f32.mrf.mxu0
    %v71 = vadd.f32 0.0, %v70
    %72 = vdwg.mxu0
    %vm73 = vcmask 130048
    %74 = vst.msk [vmem:[#allocation2] sm:$0xff] %vm73, %v68
    %75 = vst.msk [vmem:[#allocation2 + $0x8] sm:$0xff] %vm73, %v71
    %vm76 = vcmp.eq.s32.totalorder %v22, 1
    %vm77 = vcmp.eq.s32.totalorder %v23, 1
    %v78 = vsel %vm76, 1, 0
    %v79 = vsel %vm77, 1, 0
    %80 = vset.pattern.permute.xlu0 0
    %81 = vperm.xlu0 %80, %v78
    %v82 = vpop.permute.xlu0 %81
    %83 = vset.pattern.permute.xlu0 0
    %84 = vperm.xlu0 %83, %v79
    %v85 = vpop.permute.xlu0 %84
    %vm86 = vcmp.eq.s32.totalorder %v82, 1
    %vm87 = vcmp.eq.s32.totalorder %v85, 1
    %v88 = vperm.slane %v28, 1
    %v89 = vperm.slane %v28, 0
    %v90 = vsel %vm86, %v88, %v89
    %v91 = vsel %vm87, %v88, %v89
    %vm92 = vcmask 64512
    %93 = vst.msk [vmem:[%s5] sm:$0xff] %vm92, %v90
    %94 = vst.msk [vmem:[%s5 + $0x8] sm:$0xff] %vm92, %v91
    // Predicated region
    $region18: #{tpu_custom_call.1} parent=1 // pred_check
      _
    $region19: #{tpu_custom_call.1} parent=1 // pred_check_branch
      %96 = sbr.rel (0) target = $region21
    $region20: #{tpu_custom_call.1} parent=1 // pred_region
      %98 = vsyncadd [#allocation3], 0
      %s99 = sshll.u32 [#allocation2], 4
      %s100 = int_to_ptr.vmem [resolvable:$true] %s99
      %s101 = sshll.u32 %s4, 4
      %s102 = int_to_ptr.hbm [resolvable:$true] %s101
      %107 = dma.vmem_to_hbm [thread:$0]  %s100, 256, %s102, [#allocation3], 128, 128, 8
    $region21: #{tpu_custom_call.1} parent=1 // pred_fallthru
      _
    // Predicated region
    $region22: #{tpu_custom_call.1} parent=1 // pred_check
      _
    $region23: #{tpu_custom_call.1} parent=1 // pred_check_branch
      %109 = sbr.rel (0) target = $region25
    $region24: #{tpu_custom_call.1} parent=1 // pred_region
      _
    $region25: #{tpu_custom_call.1} parent=1 // pred_fallthru
      _
    // Predicated region
    $region26: #{tpu_custom_call.1} parent=1 // pred_check
      _
    $region27: #{tpu_custom_call.1} parent=1 // pred_check_branch
      %111 = sbr.rel (0) target = $region29
    $region28: #{tpu_custom_call.1} parent=1 // pred_region
      %113 = dma.done [#allocation3], 256
    $region29: #{tpu_custom_call.1} parent=1 // pred_fallthru
      _
    // Predicated region
    $region30: #{tpu_custom_call.1} parent=1 // pred_check
      _
    $region31: #{tpu_custom_call.1} parent=1 // pred_check_branch
      %115 = sbr.rel (0) target = $region33
    $region32: #{tpu_custom_call.1} parent=1 // pred_region
      _
    $region33: #{tpu_custom_call.1} parent=1 // pred_fallthru
      _
    %116 = vsyncpa [#allocation3], 1

</llo_original>
